<compile_context>
chip_gen: v6e
topology: v6e:2x2x1
jax: 0.10.0
libtpu: 0.0.40
codegen_flags: <defaults>
</compile_context>

<pallas_src>
import functools

import jax
import jax.numpy as jnp
from jax.experimental import pallas as pl
from jax.experimental.pallas import tpu as pltpu


def _round_up(x, m):
    return ((x + m - 1) // m) * m


def _decom_loss_kernel(in_low_ref, in_high_ref, r_low_ref, r_high_ref,
                       i_low_ref, i_high_ref, out_ref, pad_ref,
                       *, inv_n_rec, inv_n_grad, bt, H, W):
    f32 = jnp.float32

    def rcp(x):
        # max(g, 0.01) is strictly positive -> approx reciprocal is safe; it
        # runs on the EUP slot (which has slack) instead of a VALU divide.
        return pl.reciprocal(jnp.maximum(x, 0.01), approx=True)

    def dir_sums(axis):
        # 2x2 "gradient conv" with padding=1 as a roll-difference on the
        # zero-padded aligned planes.  The guaranteed trailing zero row/column
        # makes the wrapped element 0, so the boundary terms (|edge value|)
        # and the extra (H+1)-th row / (W+1)-th column are exact, and every
        # padded element contributes exactly 0 to every sum below.
        d = lambda p: jnp.abs(p - pltpu.roll(p, shift=1, axis=axis))
        g_il = d(pad_ref[0])
        g_ih = d(pad_ref[1])
        g_gl = d(pad_ref[2])
        g_gh = d(pad_ref[3])
        s = g_il + g_ih
        mut = jnp.sum(s * jnp.exp(-10.0 * s))
        # Outer abs of the reference is redundant: both operands are >= 0.
        ii = jnp.sum(g_ih * rcp(g_gh) + g_il * rcp(g_gl))
        return mut, ii

    rec_t = f32(0.0)
    eqr_t = f32(0.0)
    mut_t = f32(0.0)
    ii_t = f32(0.0)

    for s in range(bt):  # bt is a small static batch tile; unrolled
        in_low = in_low_ref[s].astype(f32)     # (3, H, W)
        in_high = in_high_ref[s].astype(f32)
        r_low = r_low_ref[s].astype(f32)
        r_high = r_high_ref[s].astype(f32)
        i_low = i_low_ref[s].astype(f32)       # (H, W); broadcast == cat x3
        i_high = i_high_ref[s].astype(f32)

        # Reconstruction terms need no padding; weights hoisted to scalars.
        rec_t += jnp.sum(jnp.abs(r_high * i_high - in_high)
                         + jnp.abs(r_low * i_low - in_low))
        eqr_t += jnp.sum(jnp.abs(r_low - r_high))

        gray_low = (in_low[0] + in_low[1] + in_low[2]) * (1.0 / 3.0)
        gray_high = (in_high[0] + in_high[1] + in_high[2]) * (1.0 / 3.0)

        # Zero-padded, (8,128)-aligned working planes built in VMEM; the raw
        # HxW data came straight from HBM (no wrapper-side pad pass).
        pad_ref[...] = jnp.zeros_like(pad_ref)
        pad_ref[0, :H, :W] = i_low
        pad_ref[1, :H, :W] = i_high
        pad_ref[2, :H, :W] = gray_low
        pad_ref[3, :H, :W] = gray_high

        # x-direction fully reduced first, then y-direction: halves the number
        # of live plane-sized temporaries (VMEM pressure).
        mx, ix = dir_sums(1)   # lane-axis (width) differences
        my, iy = dir_sums(0)   # sublane-axis (height) differences
        mut_t += mx + my
        ii_t += ix + iy

    partial = ((rec_t + 0.01 * eqr_t) * inv_n_rec
               + (0.2 * mut_t + 0.15 * ii_t) * inv_n_grad)
    out_ref[...] = jnp.broadcast_to(partial, out_ref.shape)


@jax.jit
def decom_loss2(input_low, input_high, R_low, I_low, R_high, I_high):
    """All args NCHW: input/R (N,3,H,W), I (N,1,H,W). Returns scalar f32."""
    N, C, H, W = input_low.shape
    assert C == 3 and I_low.shape[1] == 1

    # Size-1 squeeze is a free bitcast (unlike the old wrapper-side jnp.pad,
    # which cost a full extra HBM read+write pass over every input).
    i_low2 = I_low[:, 0]
    i_high2 = I_high[:, 0]

    # In-VMEM padded plane size: >= H+1 / W+1 so the roll trick's boundary
    # terms are exact, rounded to (8,128) for aligned vector ops.
    Hp = _round_up(H + 1, 8)
    Wp = _round_up(W + 1, 128)
    plane_f32 = Hp * Wp * 4

    try:
        vmem_cap = pltpu.get_tpu_info().vmem_capacity_bytes
    except Exception:  # conservative fallback = v7x per-TC capacity
        vmem_cap = 64 << 20

    # --- batch-tile selection: several samples per grid step for tiny images
    # (amortizes ~0.35us/step), but keep >= 2 steps when N >= 2 so both v7x
    # TensorCores get work, and stay inside a conservative VMEM budget. ---
    per_sample = 2 * (4 * C + 2) * plane_f32 + 12 * plane_f32
    bt_fit = max(1, int(0.4 * vmem_cap) // per_sample)
    bt_cap = max(1, N // 2) if N >= 2 else 1
    bt_max = max(1, min(bt_fit, bt_cap, N))
    bt = max(d for d in range(1, bt_max + 1) if N % d == 0)
    steps = N // bt

    # Divisors use the ORIGINAL (unpadded) element counts.
    inv_n_rec = 1.0 / float(N * C * H * W)
    inv_n_grad = 1.0 / float(N * (H + 1) * (W + 1))

    spec4 = pl.BlockSpec((bt, C, H, W), lambda b: (b, 0, 0, 0))
    spec_i = pl.BlockSpec((bt, H, W), lambda b: (b, 0, 0))
    out_spec = pl.BlockSpec((None, 8, 128), lambda b: (b, 0, 0))

    need = (2 * bt * (4 * C + 2) * plane_f32   # double-buffered input blocks
            + 4 * plane_f32                    # zero-padded scratch planes
            + 12 * plane_f32                   # live plane-sized temporaries
            + (2 << 20))
    vmem_limit = int(min(max(need, 32 << 20), int(0.75 * vmem_cap)))

    partials = pl.pallas_call(
        functools.partial(_decom_loss_kernel,
                          inv_n_rec=inv_n_rec, inv_n_grad=inv_n_grad,
                          bt=bt, H=H, W=W),
        grid=(steps,),
        in_specs=[spec4, spec4, spec4, spec4, spec_i, spec_i],
        out_specs=out_spec,
        out_shape=jax.ShapeDtypeStruct((steps, 8, 128), jnp.float32),
        scratch_shapes=[pltpu.VMEM((4, Hp, Wp), jnp.float32)],
        compiler_params=pltpu.CompilerParams(
            dimension_semantics=("parallel",),
            vmem_limit_bytes=vmem_limit),
    )(input_low, input_high, R_low, R_high, i_low2, i_high2)

    # Each grid step broadcast its scalar partial over a lane-dense (8,128)
    # slab (unmasked vst); the tiny cross-step reduce happens in the wrapper.
    return jnp.sum(partials[:, 0, 0])


def _decom_loss2_ref(input_low, input_high, R_low, I_low, R_high, I_high):
    """Pure-JAX reference mirroring the PyTorch semantics (for verification)."""
    gx = lambda p: jnp.abs(p[:, 1:, 1:] - p[:, 1:, :-1])
    gy = lambda p: jnp.abs(p[:, 1:, 1:] - p[:, :-1, 1:])
    pad = lambda x: jnp.pad(x, ((0, 0), (1, 1), (1, 1)))

    recon_low = jnp.mean(jnp.abs(R_low * I_low - input_low))
    recon_high = jnp.mean(jnp.abs(R_high * I_high - input_high))
    equal_r = jnp.mean(jnp.abs(R_low - R_high))

    ilp, ihp = pad(I_low[:, 0]), pad(I_high[:, 0])
    glp, ghp = pad(jnp.mean(input_low, axis=1)), pad(jnp.mean(input_high, axis=1))

    gxs, gys = gx(ilp) + gx(ihp), gy(ilp) + gy(ihp)
    i_mutual = jnp.mean(gxs * jnp.exp(-10.0 * gxs) + gys * jnp.exp(-10.0 * gys))

    def ii(ip, gp):
        return jnp.mean(jnp.abs(gx(ip) / jnp.maximum(gx(gp), 0.01))
                        + jnp.abs(gy(ip) / jnp.maximum(gy(gp), 0.01)))

    return (recon_high + recon_low + 0.01 * equal_r + 0.2 * i_mutual
            + 0.15 * ii(ihp, ghp) + 0.15 * ii(ilp, glp))


if __name__ == "__main__":
    key = jax.random.PRNGKey(0)
    k1, k2, k3, k4, k5, k6 = jax.random.split(key, 6)
    N, H, W = 2, 10, 10
    input_low = jax.random.uniform(k1, (N, 3, H, W), jnp.float32)
    input_high = jax.random.uniform(k2, (N, 3, H, W), jnp.float32)
    R_low = jax.random.uniform(k3, (N, 3, H, W), jnp.float32)
    I_low = jax.random.uniform(k4, (N, 1, H, W), jnp.float32)
    R_high = jax.random.uniform(k5, (N, 3, H, W), jnp.float32)
    I_high = jax.random.uniform(k6, (N, 1, H, W), jnp.float32)

    loss = decom_loss2(input_low, input_high, R_low, I_low, R_high, I_high)
    loss = jax.block_until_ready(loss)

    ref = _decom_loss2_ref(input_low, input_high, R_low, I_low, R_high, I_high)
    # Tolerance slightly loosened because the in-kernel divides use the EUP
    # approximate reciprocal.
    assert jnp.allclose(loss, ref, rtol=5e-3, atol=1e-3), (loss, ref)
    print("KERNEL_OK")
</pallas_src>

<mosaic_0001>
module attributes {stable_mosaic.version = 11 : i64} {
  func.func @_decom_loss_kernel(%arg0: i32, %arg1: memref<1x3x10x10xf32, #tpu.memory_space<vmem>>, %arg2: memref<1x3x10x10xf32, #tpu.memory_space<vmem>>, %arg3: memref<1x3x10x10xf32, #tpu.memory_space<vmem>>, %arg4: memref<1x3x10x10xf32, #tpu.memory_space<vmem>>, %arg5: memref<1x10x10xf32, #tpu.memory_space<vmem>>, %arg6: memref<1x10x10xf32, #tpu.memory_space<vmem>>, %arg7: memref<1x8x128xf32, #tpu.memory_space<vmem>>, %arg8: memref<4x16x128xf32, #tpu.memory_space<vmem>>) attributes {dimension_semantics = [#tpu.dimension_semantics<parallel>], iteration_bounds = array<i64: 2>, scalar_prefetch = 0 : i64, scratch_operands = 1 : i64, tpu.core_type = #tpu.core_type<tc>, window_params = [{transform_indices = @transform_0, window_bounds = array<i64: 1, 3, 10, 10>}, {transform_indices = @transform_1, window_bounds = array<i64: 1, 3, 10, 10>}, {transform_indices = @transform_2, window_bounds = array<i64: 1, 3, 10, 10>}, {transform_indices = @transform_3, window_bounds = array<i64: 1, 3, 10, 10>}, {transform_indices = @transform_4, window_bounds = array<i64: 1, 10, 10>}, {transform_indices = @transform_5, window_bounds = array<i64: 1, 10, 10>}, {transform_indices = @transform_6, window_bounds = array<i64: 1, 8, 128>}]} {
    %c0 = arith.constant 0 : index
    %c0_0 = arith.constant 0 : index
    %c0_1 = arith.constant 0 : index
    %c0_2 = arith.constant 0 : index
    %0 = vector.load %arg1[%c0, %c0_0, %c0_1, %c0_2] : memref<1x3x10x10xf32, #tpu.memory_space<vmem>>, vector<1x3x10x10xf32>
    %1 = vector.shape_cast %0 : vector<1x3x10x10xf32> to vector<3x10x10xf32>
    %c0_3 = arith.constant 0 : index
    %c0_4 = arith.constant 0 : index
    %c0_5 = arith.constant 0 : index
    %c0_6 = arith.constant 0 : index
    %2 = vector.load %arg2[%c0_3, %c0_4, %c0_5, %c0_6] : memref<1x3x10x10xf32, #tpu.memory_space<vmem>>, vector<1x3x10x10xf32>
    %3 = vector.shape_cast %2 : vector<1x3x10x10xf32> to vector<3x10x10xf32>
    %c0_7 = arith.constant 0 : index
    %c0_8 = arith.constant 0 : index
    %c0_9 = arith.constant 0 : index
    %c0_10 = arith.constant 0 : index
    %4 = vector.load %arg3[%c0_7, %c0_8, %c0_9, %c0_10] : memref<1x3x10x10xf32, #tpu.memory_space<vmem>>, vector<1x3x10x10xf32>
    %5 = vector.shape_cast %4 : vector<1x3x10x10xf32> to vector<3x10x10xf32>
    %c0_11 = arith.constant 0 : index
    %c0_12 = arith.constant 0 : index
    %c0_13 = arith.constant 0 : index
    %c0_14 = arith.constant 0 : index
    %6 = vector.load %arg4[%c0_11, %c0_12, %c0_13, %c0_14] : memref<1x3x10x10xf32, #tpu.memory_space<vmem>>, vector<1x3x10x10xf32>
    %7 = vector.shape_cast %6 : vector<1x3x10x10xf32> to vector<3x10x10xf32>
    %c0_15 = arith.constant 0 : index
    %c0_16 = arith.constant 0 : index
    %c0_17 = arith.constant 0 : index
    %8 = vector.load %arg5[%c0_15, %c0_16, %c0_17] : memref<1x10x10xf32, #tpu.memory_space<vmem>>, vector<1x10x10xf32>
    %9 = vector.shape_cast %8 : vector<1x10x10xf32> to vector<10x10xf32>
    %c0_18 = arith.constant 0 : index
    %c0_19 = arith.constant 0 : index
    %c0_20 = arith.constant 0 : index
    %10 = vector.load %arg6[%c0_18, %c0_19, %c0_20] : memref<1x10x10xf32, #tpu.memory_space<vmem>>, vector<1x10x10xf32>
    %11 = vector.shape_cast %10 : vector<1x10x10xf32> to vector<10x10xf32>
    %12 = vector.shape_cast %11 : vector<10x10xf32> to vector<1x10x10xf32>
    %13 = vector.broadcast %12 : vector<1x10x10xf32> to vector<3x10x10xf32>
    %14 = arith.mulf %7, %13 : vector<3x10x10xf32>
    %15 = arith.subf %14, %3 : vector<3x10x10xf32>
    %16 = math.absf %15 : vector<3x10x10xf32>
    %17 = vector.shape_cast %9 : vector<10x10xf32> to vector<1x10x10xf32>
    %18 = vector.broadcast %17 : vector<1x10x10xf32> to vector<3x10x10xf32>
    %19 = arith.mulf %5, %18 : vector<3x10x10xf32>
    %20 = arith.subf %19, %1 : vector<3x10x10xf32>
    %21 = math.absf %20 : vector<3x10x10xf32>
    %22 = arith.addf %16, %21 : vector<3x10x10xf32>
    %23 = vector.shape_cast %22 : vector<3x10x10xf32> to vector<1x3x10x10xf32>
    %cst = arith.constant dense<0.000000e+00> : vector<1xf32>
    %24 = vector.multi_reduction <add>, %23, %cst [1, 2, 3] : vector<1x3x10x10xf32> to vector<1xf32>
    %25 = vector.shape_cast %24 : vector<1xf32> to vector<1x1x1x1xf32>
    %26 = vector.extract %25[0, 0, 0, 0] : f32 from vector<1x1x1x1xf32>
    %cst_21 = arith.constant 0.000000e+00 : f32
    %27 = arith.addf %cst_21, %26 : f32
    %28 = arith.subf %5, %7 : vector<3x10x10xf32>
    %29 = math.absf %28 : vector<3x10x10xf32>
    %30 = vector.shape_cast %29 : vector<3x10x10xf32> to vector<1x3x10x10xf32>
    %cst_22 = arith.constant dense<0.000000e+00> : vector<1xf32>
    %31 = vector.multi_reduction <add>, %30, %cst_22 [1, 2, 3] : vector<1x3x10x10xf32> to vector<1xf32>
    %32 = vector.shape_cast %31 : vector<1xf32> to vector<1x1x1x1xf32>
    %33 = vector.extract %32[0, 0, 0, 0] : f32 from vector<1x1x1x1xf32>
    %cst_23 = arith.constant 0.000000e+00 : f32
    %34 = arith.addf %cst_23, %33 : f32
    %35 = vector.extract_strided_slice %1 {offsets = [0, 0, 0], sizes = [1, 10, 10], strides = [1, 1, 1]} : vector<3x10x10xf32> to vector<1x10x10xf32>
    %36 = vector.shape_cast %35 : vector<1x10x10xf32> to vector<10x10xf32>
    %37 = vector.extract_strided_slice %1 {offsets = [1, 0, 0], sizes = [1, 10, 10], strides = [1, 1, 1]} : vector<3x10x10xf32> to vector<1x10x10xf32>
    %38 = vector.shape_cast %37 : vector<1x10x10xf32> to vector<10x10xf32>
    %39 = arith.addf %36, %38 : vector<10x10xf32>
    %40 = vector.extract_strided_slice %1 {offsets = [2, 0, 0], sizes = [1, 10, 10], strides = [1, 1, 1]} : vector<3x10x10xf32> to vector<1x10x10xf32>
    %41 = vector.shape_cast %40 : vector<1x10x10xf32> to vector<10x10xf32>
    %42 = arith.addf %39, %41 : vector<10x10xf32>
    %cst_24 = arith.constant 0.333333343 : f32
    %43 = vector.broadcast %cst_24 : f32 to vector<10x10xf32>
    %44 = arith.mulf %42, %43 : vector<10x10xf32>
    %45 = vector.extract_strided_slice %3 {offsets = [0, 0, 0], sizes = [1, 10, 10], strides = [1, 1, 1]} : vector<3x10x10xf32> to vector<1x10x10xf32>
    %46 = vector.shape_cast %45 : vector<1x10x10xf32> to vector<10x10xf32>
    %47 = vector.extract_strided_slice %3 {offsets = [1, 0, 0], sizes = [1, 10, 10], strides = [1, 1, 1]} : vector<3x10x10xf32> to vector<1x10x10xf32>
    %48 = vector.shape_cast %47 : vector<1x10x10xf32> to vector<10x10xf32>
    %49 = arith.addf %46, %48 : vector<10x10xf32>
    %50 = vector.extract_strided_slice %3 {offsets = [2, 0, 0], sizes = [1, 10, 10], strides = [1, 1, 1]} : vector<3x10x10xf32> to vector<1x10x10xf32>
    %51 = vector.shape_cast %50 : vector<1x10x10xf32> to vector<10x10xf32>
    %52 = arith.addf %49, %51 : vector<10x10xf32>
    %cst_25 = arith.constant 0.333333343 : f32
    %53 = vector.broadcast %cst_25 : f32 to vector<10x10xf32>
    %54 = arith.mulf %52, %53 : vector<10x10xf32>
    %cst_26 = arith.constant 0.000000e+00 : f32
    %55 = vector.broadcast %cst_26 : f32 to vector<4x16x128xf32>
    %c0_27 = arith.constant 0 : index
    %c0_28 = arith.constant 0 : index
    %c0_29 = arith.constant 0 : index
    %56 = vector.load %arg8[%c0_27, %c0_28, %c0_29] : memref<4x16x128xf32, #tpu.memory_space<vmem>>, vector<4x16x128xf32>
    tpu.vector_store %arg8[%c0_27, %c0_28, %c0_29], %55 {strides = array<i32>} : memref<4x16x128xf32, #tpu.memory_space<vmem>>, vector<4x16x128xf32>,
    %c0_30 = arith.constant 0 : index
    %c0_31 = arith.constant 0 : index
    %c0_32 = arith.constant 0 : index
    %57 = vector.load %arg8[%c0_30, %c0_31, %c0_32] : memref<4x16x128xf32, #tpu.memory_space<vmem>>, vector<1x10x10xf32>
    %58 = vector.shape_cast %57 : vector<1x10x10xf32> to vector<10x10xf32>
    %59 = vector.shape_cast %9 : vector<10x10xf32> to vector<1x10x10xf32>
    tpu.vector_store %arg8[%c0_30, %c0_31, %c0_32], %59 {strides = array<i32>} : memref<4x16x128xf32, #tpu.memory_space<vmem>>, vector<1x10x10xf32>,
    %c1 = arith.constant 1 : index
    %c0_33 = arith.constant 0 : index
    %c0_34 = arith.constant 0 : index
    %60 = vector.load %arg8[%c1, %c0_33, %c0_34] : memref<4x16x128xf32, #tpu.memory_space<vmem>>, vector<1x10x10xf32>
    %61 = vector.shape_cast %60 : vector<1x10x10xf32> to vector<10x10xf32>
    %62 = vector.shape_cast %11 : vector<10x10xf32> to vector<1x10x10xf32>
    tpu.vector_store %arg8[%c1, %c0_33, %c0_34], %62 {strides = array<i32>} : memref<4x16x128xf32, #tpu.memory_space<vmem>>, vector<1x10x10xf32>,
    %c2 = arith.constant 2 : index
    %c0_35 = arith.constant 0 : index
    %c0_36 = arith.constant 0 : index
    %63 = vector.load %arg8[%c2, %c0_35, %c0_36] : memref<4x16x128xf32, #tpu.memory_space<vmem>>, vector<1x10x10xf32>
    %64 = vector.shape_cast %63 : vector<1x10x10xf32> to vector<10x10xf32>
    %65 = vector.shape_cast %44 : vector<10x10xf32> to vector<1x10x10xf32>
    tpu.vector_store %arg8[%c2, %c0_35, %c0_36], %65 {strides = array<i32>} : memref<4x16x128xf32, #tpu.memory_space<vmem>>, vector<1x10x10xf32>,
    %c3 = arith.constant 3 : index
    %c0_37 = arith.constant 0 : index
    %c0_38 = arith.constant 0 : index
    %66 = vector.load %arg8[%c3, %c0_37, %c0_38] : memref<4x16x128xf32, #tpu.memory_space<vmem>>, vector<1x10x10xf32>
    %67 = vector.shape_cast %66 : vector<1x10x10xf32> to vector<10x10xf32>
    %68 = vector.shape_cast %54 : vector<10x10xf32> to vector<1x10x10xf32>
    tpu.vector_store %arg8[%c3, %c0_37, %c0_38], %68 {strides = array<i32>} : memref<4x16x128xf32, #tpu.memory_space<vmem>>, vector<1x10x10xf32>,
    %c0_39 = arith.constant 0 : index
    %c0_40 = arith.constant 0 : index
    %c0_41 = arith.constant 0 : index
    %69 = vector.load %arg8[%c0_39, %c0_40, %c0_41] : memref<4x16x128xf32, #tpu.memory_space<vmem>>, vector<1x16x128xf32>
    %70 = vector.shape_cast %69 : vector<1x16x128xf32> to vector<16x128xf32>
    %c1_i32 = arith.constant 1 : i32
    %71 = tpu.dynamic_rotate %70 by %c1_i32 dim 1 : vector<16x128xf32>, i32 -> vector<16x128xf32>
    %72 = arith.subf %70, %71 : vector<16x128xf32>
    %73 = math.absf %72 : vector<16x128xf32>
    %c1_42 = arith.constant 1 : index
    %c0_43 = arith.constant 0 : index
    %c0_44 = arith.constant 0 : index
    %74 = vector.load %arg8[%c1_42, %c0_43, %c0_44] : memref<4x16x128xf32, #tpu.memory_space<vmem>>, vector<1x16x128xf32>
    %75 = vector.shape_cast %74 : vector<1x16x128xf32> to vector<16x128xf32>
    %c1_i32_45 = arith.constant 1 : i32
    %76 = tpu.dynamic_rotate %75 by %c1_i32_45 dim 1 : vector<16x128xf32>, i32 -> vector<16x128xf32>
    %77 = arith.subf %75, %76 : vector<16x128xf32>
    %78 = math.absf %77 : vector<16x128xf32>
    %c2_46 = arith.constant 2 : index
    %c0_47 = arith.constant 0 : index
    %c0_48 = arith.constant 0 : index
    %79 = vector.load %arg8[%c2_46, %c0_47, %c0_48] : memref<4x16x128xf32, #tpu.memory_space<vmem>>, vector<1x16x128xf32>
    %80 = vector.shape_cast %79 : vector<1x16x128xf32> to vector<16x128xf32>
    %c1_i32_49 = arith.constant 1 : i32
    %81 = tpu.dynamic_rotate %80 by %c1_i32_49 dim 1 : vector<16x128xf32>, i32 -> vector<16x128xf32>
    %82 = arith.subf %80, %81 : vector<16x128xf32>
    %83 = math.absf %82 : vector<16x128xf32>
    %c3_50 = arith.constant 3 : index
    %c0_51 = arith.constant 0 : index
    %c0_52 = arith.constant 0 : index
    %84 = vector.load %arg8[%c3_50, %c0_51, %c0_52] : memref<4x16x128xf32, #tpu.memory_space<vmem>>, vector<1x16x128xf32>
    %85 = vector.shape_cast %84 : vector<1x16x128xf32> to vector<16x128xf32>
    %c1_i32_53 = arith.constant 1 : i32
    %86 = tpu.dynamic_rotate %85 by %c1_i32_53 dim 1 : vector<16x128xf32>, i32 -> vector<16x128xf32>
    %87 = arith.subf %85, %86 : vector<16x128xf32>
    %88 = math.absf %87 : vector<16x128xf32>
    %89 = arith.addf %73, %78 : vector<16x128xf32>
    %cst_54 = arith.constant -1.000000e+01 : f32
    %90 = vector.broadcast %cst_54 : f32 to vector<16x128xf32>
    %91 = arith.mulf %90, %89 : vector<16x128xf32>
    %92 = math.exp %91 : vector<16x128xf32>
    %93 = arith.mulf %89, %92 : vector<16x128xf32>
    %94 = vector.shape_cast %93 : vector<16x128xf32> to vector<1x16x128xf32>
    %cst_55 = arith.constant dense<0.000000e+00> : vector<1xf32>
    %95 = vector.multi_reduction <add>, %94, %cst_55 [1, 2] : vector<1x16x128xf32> to vector<1xf32>
    %96 = vector.shape_cast %95 : vector<1xf32> to vector<1x1x1xf32>
    %97 = vector.extract %96[0, 0, 0] : f32 from vector<1x1x1xf32>
    %cst_56 = arith.constant 0.00999999977 : f32
    %98 = vector.broadcast %cst_56 : f32 to vector<16x128xf32>
    %99 = arith.maximumf %88, %98 : vector<16x128xf32>
    %100 = tpu.reciprocal %99 {approx = true} : vector<16x128xf32> -> vector<16x128xf32>
    %101 = arith.mulf %78, %100 : vector<16x128xf32>
    %cst_57 = arith.constant 0.00999999977 : f32
    %102 = vector.broadcast %cst_57 : f32 to vector<16x128xf32>
    %103 = arith.maximumf %83, %102 : vector<16x128xf32>
    %104 = tpu.reciprocal %103 {approx = true} : vector<16x128xf32> -> vector<16x128xf32>
    %105 = arith.mulf %73, %104 : vector<16x128xf32>
    %106 = arith.addf %101, %105 : vector<16x128xf32>
    %107 = vector.shape_cast %106 : vector<16x128xf32> to vector<1x16x128xf32>
    %cst_58 = arith.constant dense<0.000000e+00> : vector<1xf32>
    %108 = vector.multi_reduction <add>, %107, %cst_58 [1, 2] : vector<1x16x128xf32> to vector<1xf32>
    %109 = vector.shape_cast %108 : vector<1xf32> to vector<1x1x1xf32>
    %110 = vector.extract %109[0, 0, 0] : f32 from vector<1x1x1xf32>
    %c0_59 = arith.constant 0 : index
    %c0_60 = arith.constant 0 : index
    %c0_61 = arith.constant 0 : index
    %111 = vector.load %arg8[%c0_59, %c0_60, %c0_61] : memref<4x16x128xf32, #tpu.memory_space<vmem>>, vector<1x16x128xf32>
    %112 = vector.shape_cast %111 : vector<1x16x128xf32> to vector<16x128xf32>
    %c1_i32_62 = arith.constant 1 : i32
    %113 = tpu.dynamic_rotate %112 by %c1_i32_62 dim 0 : vector<16x128xf32>, i32 -> vector<16x128xf32>
    %114 = arith.subf %112, %113 : vector<16x128xf32>
    %115 = math.absf %114 : vector<16x128xf32>
    %c1_63 = arith.constant 1 : index
    %c0_64 = arith.constant 0 : index
    %c0_65 = arith.constant 0 : index
    %116 = vector.load %arg8[%c1_63, %c0_64, %c0_65] : memref<4x16x128xf32, #tpu.memory_space<vmem>>, vector<1x16x128xf32>
    %117 = vector.shape_cast %116 : vector<1x16x128xf32> to vector<16x128xf32>
    %c1_i32_66 = arith.constant 1 : i32
    %118 = tpu.dynamic_rotate %117 by %c1_i32_66 dim 0 : vector<16x128xf32>, i32 -> vector<16x128xf32>
    %119 = arith.subf %117, %118 : vector<16x128xf32>
    %120 = math.absf %119 : vector<16x128xf32>
    %c2_67 = arith.constant 2 : index
    %c0_68 = arith.constant 0 : index
    %c0_69 = arith.constant 0 : index
    %121 = vector.load %arg8[%c2_67, %c0_68, %c0_69] : memref<4x16x128xf32, #tpu.memory_space<vmem>>, vector<1x16x128xf32>
    %122 = vector.shape_cast %121 : vector<1x16x128xf32> to vector<16x128xf32>
    %c1_i32_70 = arith.constant 1 : i32
    %123 = tpu.dynamic_rotate %122 by %c1_i32_70 dim 0 : vector<16x128xf32>, i32 -> vector<16x128xf32>
    %124 = arith.subf %122, %123 : vector<16x128xf32>
    %125 = math.absf %124 : vector<16x128xf32>
    %c3_71 = arith.constant 3 : index
    %c0_72 = arith.constant 0 : index
    %c0_73 = arith.constant 0 : index
    %126 = vector.load %arg8[%c3_71, %c0_72, %c0_73] : memref<4x16x128xf32, #tpu.memory_space<vmem>>, vector<1x16x128xf32>
    %127 = vector.shape_cast %126 : vector<1x16x128xf32> to vector<16x128xf32>
    %c1_i32_74 = arith.constant 1 : i32
    %128 = tpu.dynamic_rotate %127 by %c1_i32_74 dim 0 : vector<16x128xf32>, i32 -> vector<16x128xf32>
    %129 = arith.subf %127, %128 : vector<16x128xf32>
    %130 = math.absf %129 : vector<16x128xf32>
    %131 = arith.addf %115, %120 : vector<16x128xf32>
    %cst_75 = arith.constant -1.000000e+01 : f32
    %132 = vector.broadcast %cst_75 : f32 to vector<16x128xf32>
    %133 = arith.mulf %132, %131 : vector<16x128xf32>
    %134 = math.exp %133 : vector<16x128xf32>
    %135 = arith.mulf %131, %134 : vector<16x128xf32>
    %136 = vector.shape_cast %135 : vector<16x128xf32> to vector<1x16x128xf32>
    %cst_76 = arith.constant dense<0.000000e+00> : vector<1xf32>
    %137 = vector.multi_reduction <add>, %136, %cst_76 [1, 2] : vector<1x16x128xf32> to vector<1xf32>
    %138 = vector.shape_cast %137 : vector<1xf32> to vector<1x1x1xf32>
    %139 = vector.extract %138[0, 0, 0] : f32 from vector<1x1x1xf32>
    %cst_77 = arith.constant 0.00999999977 : f32
    %140 = vector.broadcast %cst_77 : f32 to vector<16x128xf32>
    %141 = arith.maximumf %130, %140 : vector<16x128xf32>
    %142 = tpu.reciprocal %141 {approx = true} : vector<16x128xf32> -> vector<16x128xf32>
    %143 = arith.mulf %120, %142 : vector<16x128xf32>
    %cst_78 = arith.constant 0.00999999977 : f32
    %144 = vector.broadcast %cst_78 : f32 to vector<16x128xf32>
    %145 = arith.maximumf %125, %144 : vector<16x128xf32>
    %146 = tpu.reciprocal %145 {approx = true} : vector<16x128xf32> -> vector<16x128xf32>
    %147 = arith.mulf %115, %146 : vector<16x128xf32>
    %148 = arith.addf %143, %147 : vector<16x128xf32>
    %149 = vector.shape_cast %148 : vector<16x128xf32> to vector<1x16x128xf32>
    %cst_79 = arith.constant dense<0.000000e+00> : vector<1xf32>
    %150 = vector.multi_reduction <add>, %149, %cst_79 [1, 2] : vector<1x16x128xf32> to vector<1xf32>
    %151 = vector.shape_cast %150 : vector<1xf32> to vector<1x1x1xf32>
    %152 = vector.extract %151[0, 0, 0] : f32 from vector<1x1x1xf32>
    %153 = arith.addf %97, %139 : f32
    %cst_80 = arith.constant 0.000000e+00 : f32
    %154 = arith.addf %cst_80, %153 : f32
    %155 = arith.addf %110, %152 : f32
    %cst_81 = arith.constant 0.000000e+00 : f32
    %156 = arith.addf %cst_81, %155 : f32
    %cst_82 = arith.constant 0.00999999977 : f32
    %157 = arith.mulf %cst_82, %34 : f32
    %158 = arith.addf %27, %157 : f32
    %cst_83 = arith.constant 0.00166666671 : f32
    %159 = arith.mulf %158, %cst_83 : f32
    %cst_84 = arith.constant 2.000000e-01 : f32
    %160 = arith.mulf %cst_84, %154 : f32
    %cst_85 = arith.constant 1.500000e-01 : f32
    %161 = arith.mulf %cst_85, %156 : f32
    %162 = arith.addf %160, %161 : f32
    %cst_86 = arith.constant 0.00413223123 : f32
    %163 = arith.mulf %162, %cst_86 : f32
    %164 = arith.addf %159, %163 : f32
    %165 = vector.broadcast %164 : f32 to vector<8x128xf32>
    %c0_87 = arith.constant 0 : index
    %c0_88 = arith.constant 0 : index
    %c0_89 = arith.constant 0 : index
    %166 = vector.load %arg7[%c0_87, %c0_88, %c0_89] : memref<1x8x128xf32, #tpu.memory_space<vmem>>, vector<1x8x128xf32>
    %167 = vector.shape_cast %166 : vector<1x8x128xf32> to vector<8x128xf32>
    %168 = vector.shape_cast %165 : vector<8x128xf32> to vector<1x8x128xf32>
    tpu.vector_store %arg7[%c0_87, %c0_88, %c0_89], %168 {strides = array<i32>} : memref<1x8x128xf32, #tpu.memory_space<vmem>>, vector<1x8x128xf32>,
    return
  }
  func.func @transform_0(%arg0: i32) -> (i32, i32, i32, i32) {
    %c0_i32 = arith.constant 0 : i32
    %c0_i32_0 = arith.constant 0 : i32
    %c0_i32_1 = arith.constant 0 : i32
    %c0_i32_2 = arith.constant 0 : i32
    return %arg0, %c0_i32, %c0_i32_0, %c0_i32_1 : i32, i32, i32, i32
  }
  func.func @transform_1(%arg0: i32) -> (i32, i32, i32, i32) {
    %c0_i32 = arith.constant 0 : i32
    %c0_i32_0 = arith.constant 0 : i32
    %c0_i32_1 = arith.constant 0 : i32
    %c0_i32_2 = arith.constant 0 : i32
    return %arg0, %c0_i32, %c0_i32_0, %c0_i32_1 : i32, i32, i32, i32
  }
  func.func @transform_2(%arg0: i32) -> (i32, i32, i32, i32) {
    %c0_i32 = arith.constant 0 : i32
    %c0_i32_0 = arith.constant 0 : i32
    %c0_i32_1 = arith.constant 0 : i32
    %c0_i32_2 = arith.constant 0 : i32
    return %arg0, %c0_i32, %c0_i32_0, %c0_i32_1 : i32, i32, i32, i32
  }
  func.func @transform_3(%arg0: i32) -> (i32, i32, i32, i32) {
    %c0_i32 = arith.constant 0 : i32
    %c0_i32_0 = arith.constant 0 : i32
    %c0_i32_1 = arith.constant 0 : i32
    %c0_i32_2 = arith.constant 0 : i32
    return %arg0, %c0_i32, %c0_i32_0, %c0_i32_1 : i32, i32, i32, i32
  }
  func.func @transform_4(%arg0: i32) -> (i32, i32, i32) {
    %c0_i32 = arith.constant 0 : i32
    %c0_i32_0 = arith.constant 0 : i32
    %c0_i32_1 = arith.constant 0 : i32
    return %arg0, %c0_i32, %c0_i32_0 : i32, i32, i32
  }
  func.func @transform_5(%arg0: i32) -> (i32, i32, i32) {
    %c0_i32 = arith.constant 0 : i32
    %c0_i32_0 = arith.constant 0 : i32
    %c0_i32_1 = arith.constant 0 : i32
    return %arg0, %c0_i32, %c0_i32_0 : i32, i32, i32
  }
  func.func @transform_6(%arg0: i32) -> (i32, i32, i32) {
    %c0_i32 = arith.constant 0 : i32
    %c0_i32_0 = arith.constant 0 : i32
    %c0_i32_1 = arith.constant 0 : i32
    return %arg0, %c0_i32, %c0_i32_0 : i32, i32, i32
  }
}

</mosaic_0001>

<llo_original>
// kernel: decom_loss2.1
$region0: #{decom_loss2.1}
  #allocation0 [shape = 'u32[]', space=smem, size = 0x4, offset = 0x4, fixed_abs, tag = 'smem constant byte address 0x4 - core index']
  #allocation1 [shape = 'u32[144,128]{1,0:T(1,128)}', space=vmem, size = 0x12000, scoped, tag = 'internal scratch']
  #allocation2 [shape = 'f32[4,16,128]{2,1,0:T(8,128)}', space=vmem, size = 0x8000, scoped, tag = 'scratch operand']
  %s0 = inlined_call_operand.vmem [shape: f32[2,3,10,10], index: 0, kind: input, shape index: {}]
  %s1 = inlined_call_operand.vmem [shape: f32[2,3,10,10], index: 1, kind: input, shape index: {}]
  %s2 = inlined_call_operand.vmem [shape: f32[2,3,10,10], index: 2, kind: input, shape index: {}]
  %s3 = inlined_call_operand.vmem [shape: f32[2,3,10,10], index: 3, kind: input, shape index: {}]
  %s4 = inlined_call_operand.vmem [shape: f32[2,10,10], index: 4, kind: input, shape index: {}]
  %s5 = inlined_call_operand.vmem [shape: f32[2,10,10], index: 5, kind: input, shape index: {}]
  %s6 = inlined_call_operand.vmem [shape: f32[2,8,128], index: 6, kind: output, shape index: {}]
  %s7 = sld [smem:[#allocation0]]
  $region57: #{decom_loss2.1} parent=0
    _
  %s9 = ssub.s32 1, %s7
  %s10 = scalar_select 0, %s9, %s7
  loop: start=0, step=1, limit=4
  $region2: #{decom_loss2.1} parent=0 // loop_pre_header
    _
  $region3: #{decom_loss2.1} parent=0 // loop_header
    %s12 = sphi 0, %s16
    %p13 = scmp.ge.s32.totalorder %s12, 4
    %s22 = sphi 0, %s24
    %s25 = sphi 0, %s22
    %s26 = sphi 0, %s25
    %s42 = sphi 0, %s26
    %s48 = sphi 0, %s50
    %s51 = sphi 0, %s48
    %s52 = sphi 0, %s51
    %s68 = sphi 0, %s52
    %s74 = sphi 0, %s76
    %s77 = sphi 0, %s74
    %s78 = sphi 0, %s77
    %s94 = sphi 0, %s78
    %s100 = sphi 0, %s102
    %s103 = sphi 0, %s100
    %s104 = sphi 0, %s103
    %s120 = sphi 0, %s104
    %s126 = sphi 0, %s128
    %s129 = sphi 0, %s126
    %s130 = sphi 0, %s129
    %s146 = sphi 0, %s130
    %s152 = sphi 0, %s154
    %s155 = sphi 0, %s152
    %s156 = sphi 0, %s155
    %s172 = sphi 0, %s156
    %s178 = sphi 0, %s180
    %s181 = sphi 0, %s178
    %s182 = sphi 0, %s181
    %s198 = sphi 0, %s182
  $region4: #{decom_loss2.1} parent=0 // loop_header_branch
    %15 = sbr.rel (%p13) target = $region8
  $region5: #{decom_loss2.1} parent=0 // loop_body
    %s17 = ssub.s32 %s12, 1
    %s18 = ssub.s32 %s12, 2
    %s19 = sadd.s32 %s12, 1
    %s20 = ssub.s32 %s12, %s19
    %p21 = scmp.eq.s32.totalorder %s20, 0
    %s23 = sadd.s32 %s22, 1
    %s24 = scalar_select %p21, %s22, %s23
    %p27 = pneg %p21
    %p28 = scmp.eq.s32.totalorder %s12, 1
    %p29 = por %p27, %p28
    %p30 = scmp.ne.s32.totalorder %s22, %s25
    %p31 = scmp.eq.s32.totalorder %s12, 0
    %p32 = por %p30, %p31
    %p33 = scmp.ne.s32.totalorder %s22, %s25
    %p34 = scmp.eq.s32.totalorder %s17, 1
    %p35 = por %p33, %p34
    %p36 = scmp.ne.s32.totalorder %s25, %s26
    %p37 = scmp.eq.s32.totalorder %s17, 0
    %p38 = por %p36, %p37
    %p39 = scmp.ne.s32.totalorder %s25, %s26
    %p40 = scmp.eq.s32.totalorder %s18, 1
    %p41 = por %p39, %p40
    %p43 = scmp.ne.s32.totalorder %s26, %s42
    %p44 = scmp.eq.s32.totalorder %s18, 0
    %p45 = por %p43, %p44
    %s46 = ssub.s32 %s12, %s19
    %p47 = scmp.eq.s32.totalorder %s46, 0
    %s49 = sadd.s32 %s48, 1
    %s50 = scalar_select %p47, %s48, %s49
    %p53 = pneg %p47
    %p54 = scmp.eq.s32.totalorder %s12, 1
    %p55 = por %p53, %p54
    %p56 = scmp.ne.s32.totalorder %s48, %s51
    %p57 = scmp.eq.s32.totalorder %s12, 0
    %p58 = por %p56, %p57
    %p59 = scmp.ne.s32.totalorder %s48, %s51
    %p60 = scmp.eq.s32.totalorder %s17, 1
    %p61 = por %p59, %p60
    %p62 = scmp.ne.s32.totalorder %s51, %s52
    %p63 = scmp.eq.s32.totalorder %s17, 0
    %p64 = por %p62, %p63
    %p65 = scmp.ne.s32.totalorder %s51, %s52
    %p66 = scmp.eq.s32.totalorder %s18, 1
    %p67 = por %p65, %p66
    %p69 = scmp.ne.s32.totalorder %s52, %s68
    %p70 = scmp.eq.s32.totalorder %s18, 0
    %p71 = por %p69, %p70
    %s72 = ssub.s32 %s12, %s19
    %p73 = scmp.eq.s32.totalorder %s72, 0
    %s75 = sadd.s32 %s74, 1
    %s76 = scalar_select %p73, %s74, %s75
    %p79 = pneg %p73
    %p80 = scmp.eq.s32.totalorder %s12, 1
    %p81 = por %p79, %p80
    %p82 = scmp.ne.s32.totalorder %s74, %s77
    %p83 = scmp.eq.s32.totalorder %s12, 0
    %p84 = por %p82, %p83
    %p85 = scmp.ne.s32.totalorder %s74, %s77
    %p86 = scmp.eq.s32.totalorder %s17, 1
    %p87 = por %p85, %p86
    %p88 = scmp.ne.s32.totalorder %s77, %s78
    %p89 = scmp.eq.s32.totalorder %s17, 0
    %p90 = por %p88, %p89
    %p91 = scmp.ne.s32.totalorder %s77, %s78
    %p92 = scmp.eq.s32.totalorder %s18, 1
    %p93 = por %p91, %p92
    %p95 = scmp.ne.s32.totalorder %s78, %s94
    %p96 = scmp.eq.s32.totalorder %s18, 0
    %p97 = por %p95, %p96
    %s98 = ssub.s32 %s12, %s19
    %p99 = scmp.eq.s32.totalorder %s98, 0
    %s101 = sadd.s32 %s100, 1
    %s102 = scalar_select %p99, %s100, %s101
    %p105 = pneg %p99
    %p106 = scmp.eq.s32.totalorder %s12, 1
    %p107 = por %p105, %p106
    %p108 = scmp.ne.s32.totalorder %s100, %s103
    %p109 = scmp.eq.s32.totalorder %s12, 0
    %p110 = por %p108, %p109
    %p111 = scmp.ne.s32.totalorder %s100, %s103
    %p112 = scmp.eq.s32.totalorder %s17, 1
    %p113 = por %p111, %p112
    %p114 = scmp.ne.s32.totalorder %s103, %s104
    %p115 = scmp.eq.s32.totalorder %s17, 0
    %p116 = por %p114, %p115
    %p117 = scmp.ne.s32.totalorder %s103, %s104
    %p118 = scmp.eq.s32.totalorder %s18, 1
    %p119 = por %p117, %p118
    %p121 = scmp.ne.s32.totalorder %s104, %s120
    %p122 = scmp.eq.s32.totalorder %s18, 0
    %p123 = por %p121, %p122
    %s124 = ssub.s32 %s12, %s19
    %p125 = scmp.eq.s32.totalorder %s124, 0
    %s127 = sadd.s32 %s126, 1
    %s128 = scalar_select %p125, %s126, %s127
    %p131 = pneg %p125
    %p132 = scmp.eq.s32.totalorder %s12, 1
    %p133 = por %p131, %p132
    %p134 = scmp.ne.s32.totalorder %s126, %s129
    %p135 = scmp.eq.s32.totalorder %s12, 0
    %p136 = por %p134, %p135
    %p137 = scmp.ne.s32.totalorder %s126, %s129
    %p138 = scmp.eq.s32.totalorder %s17, 1
    %p139 = por %p137, %p138
    %p140 = scmp.ne.s32.totalorder %s129, %s130
    %p141 = scmp.eq.s32.totalorder %s17, 0
    %p142 = por %p140, %p141
    %p143 = scmp.ne.s32.totalorder %s129, %s130
    %p144 = scmp.eq.s32.totalorder %s18, 1
    %p145 = por %p143, %p144
    %p147 = scmp.ne.s32.totalorder %s130, %s146
    %p148 = scmp.eq.s32.totalorder %s18, 0
    %p149 = por %p147, %p148
    %s150 = ssub.s32 %s12, %s19
    %p151 = scmp.eq.s32.totalorder %s150, 0
    %s153 = sadd.s32 %s152, 1
    %s154 = scalar_select %p151, %s152, %s153
    %p157 = pneg %p151
    %p158 = scmp.eq.s32.totalorder %s12, 1
    %p159 = por %p157, %p158
    %p160 = scmp.ne.s32.totalorder %s152, %s155
    %p161 = scmp.eq.s32.totalorder %s12, 0
    %p162 = por %p160, %p161
    %p163 = scmp.ne.s32.totalorder %s152, %s155
    %p164 = scmp.eq.s32.totalorder %s17, 1
    %p165 = por %p163, %p164
    %p166 = scmp.ne.s32.totalorder %s155, %s156
    %p167 = scmp.eq.s32.totalorder %s17, 0
    %p168 = por %p166, %p167
    %p169 = scmp.ne.s32.totalorder %s155, %s156
    %p170 = scmp.eq.s32.totalorder %s18, 1
    %p171 = por %p169, %p170
    %p173 = scmp.ne.s32.totalorder %s156, %s172
    %p174 = scmp.eq.s32.totalorder %s18, 0
    %p175 = por %p173, %p174
    %s176 = ssub.s32 %s12, %s19
    %p177 = scmp.eq.s32.totalorder %s176, 0
    %s179 = sadd.s32 %s178, 1
    %s180 = scalar_select %p177, %s178, %s179
    %p183 = pneg %p177
    %p184 = scmp.eq.s32.totalorder %s12, 1
    %p185 = por %p183, %p184
    %p186 = scmp.ne.s32.totalorder %s178, %s181
    %p187 = scmp.eq.s32.totalorder %s12, 0
    %p188 = por %p186, %p187
    %p189 = scmp.ne.s32.totalorder %s178, %s181
    %p190 = scmp.eq.s32.totalorder %s17, 1
    %p191 = por %p189, %p190
    %p192 = scmp.ne.s32.totalorder %s181, %s182
    %p193 = scmp.eq.s32.totalorder %s17, 0
    %p194 = por %p192, %p193
    %p195 = scmp.ne.s32.totalorder %s181, %s182
    %p196 = scmp.eq.s32.totalorder %s18, 1
    %p197 = por %p195, %p196
    %p199 = scmp.ne.s32.totalorder %s182, %s198
    %p200 = scmp.eq.s32.totalorder %s18, 0
    %p201 = por %p199, %p200
    %p202 = scmp.le.s32.totalorder 1, %s12
    %p203 = scmp.lt.s32.totalorder %s12, 3
    %p204 = pnand %p202, %p203
    %p205 = pneg %p204
    // Predicated region
    $region9: #{decom_loss2.1} parent=5 // pred_check
      _
    $region10: #{decom_loss2.1} parent=5 // pred_check_branch
      %207 = sbr.rel (%p204) target = $region12
    $region11: #{decom_loss2.1} parent=5 // pred_region
      %s208 = ssub.s32 %s12, 1
    $region12: #{decom_loss2.1} parent=5 // pred_fallthru
      _
    %p209 = scmp.lt.s32.totalorder %s12, 2
    // Predicated region
    $region13: #{decom_loss2.1} parent=5 // pred_check
      %p210 = pneg %p209
    $region14: #{decom_loss2.1} parent=5 // pred_check_branch
      %212 = sbr.rel (%p210) target = $region16
    $region15: #{decom_loss2.1} parent=5 // pred_region
      // Predicated region
      $region17: #{decom_loss2.1} parent=15 // pred_check
        %p213 = pneg %p32
      $region18: #{decom_loss2.1} parent=15 // pred_check_branch
        %215 = sbr.rel (%p213) target = $region20
      $region19: #{decom_loss2.1} parent=15 // pred_region
        %p216 = scmp.lt.s32.totalorder %s12, 1
        %s217 = scalar_select %p216, %s12, 1
        %s218 = smul.addr %s217, 6
        %s219 = smul.addr %s218, 8
        %s220 = scalar_lea.vmem %s0, %s219
      $region20: #{decom_loss2.1} parent=15 // pred_fallthru
        _
      // Predicated region
      $region21: #{decom_loss2.1} parent=15 // pred_check
        %p221 = pneg %p58
      $region22: #{decom_loss2.1} parent=15 // pred_check_branch
        %223 = sbr.rel (%p221) target = $region24
      $region23: #{decom_loss2.1} parent=15 // pred_region
        %p224 = scmp.lt.s32.totalorder %s12, 1
        %s225 = scalar_select %p224, %s12, 1
        %s226 = smul.addr %s225, 6
        %s227 = smul.addr %s226, 8
        %s228 = scalar_lea.vmem %s1, %s227
      $region24: #{decom_loss2.1} parent=15 // pred_fallthru
        _
      // Predicated region
      $region25: #{decom_loss2.1} parent=15 // pred_check
        %p229 = pneg %p84
      $region26: #{decom_loss2.1} parent=15 // pred_check_branch
        %231 = sbr.rel (%p229) target = $region28
      $region27: #{decom_loss2.1} parent=15 // pred_region
        %p232 = scmp.lt.s32.totalorder %s12, 1
        %s233 = scalar_select %p232, %s12, 1
        %s234 = smul.addr %s233, 6
        %s235 = smul.addr %s234, 8
        %s236 = scalar_lea.vmem %s2, %s235
      $region28: #{decom_loss2.1} parent=15 // pred_fallthru
        _
      // Predicated region
      $region29: #{decom_loss2.1} parent=15 // pred_check
        %p237 = pneg %p110
      $region30: #{decom_loss2.1} parent=15 // pred_check_branch
        %239 = sbr.rel (%p237) target = $region32
      $region31: #{decom_loss2.1} parent=15 // pred_region
        %p240 = scmp.lt.s32.totalorder %s12, 1
        %s241 = scalar_select %p240, %s12, 1
        %s242 = smul.addr %s241, 6
        %s243 = smul.addr %s242, 8
        %s244 = scalar_lea.vmem %s3, %s243
      $region32: #{decom_loss2.1} parent=15 // pred_fallthru
        _
      // Predicated region
      $region33: #{decom_loss2.1} parent=15 // pred_check
        %p245 = pneg %p136
      $region34: #{decom_loss2.1} parent=15 // pred_check_branch
        %247 = sbr.rel (%p245) target = $region36
      $region35: #{decom_loss2.1} parent=15 // pred_region
        %p248 = scmp.lt.s32.totalorder %s12, 1
        %s249 = scalar_select %p248, %s12, 1
        %s250 = smul.addr %s249, 2
        %s251 = smul.addr %s250, 8
        %s252 = scalar_lea.vmem %s4, %s251
      $region36: #{decom_loss2.1} parent=15 // pred_fallthru
        _
      // Predicated region
      $region37: #{decom_loss2.1} parent=15 // pred_check
        %p253 = pneg %p162
      $region38: #{decom_loss2.1} parent=15 // pred_check_branch
        %255 = sbr.rel (%p253) target = $region40
      $region39: #{decom_loss2.1} parent=15 // pred_region
        %p256 = scmp.lt.s32.totalorder %s12, 1
        %s257 = scalar_select %p256, %s12, 1
        %s258 = smul.addr %s257, 2
        %s259 = smul.addr %s258, 8
        %s260 = scalar_lea.vmem %s5, %s259
      $region40: #{decom_loss2.1} parent=15 // pred_fallthru
        _
    $region16: #{decom_loss2.1} parent=5 // pred_fallthru
      _
    %p261 = scmp.le.s32.totalorder 1, %s12
    %p262 = scmp.lt.s32.totalorder %s12, 3
    %p263 = pnand %p261, %p262
    %p264 = pneg %p263
    // Predicated region
    $region41: #{decom_loss2.1} parent=5 // pred_check
      _
    $region42: #{decom_loss2.1} parent=5 // pred_check_branch
      %266 = sbr.rel (%p263) target = $region44
    $region43: #{decom_loss2.1} parent=5 // pred_region
      %s267 = ssub.s32 %s12, 1
      %p268 = scmp.lt.s32.totalorder %s17, 1
      %s269 = scalar_select %p268, %s17, 1
      %s270 = smul.addr %s269, 6
      %s271 = smul.addr %s270, 8
      %s272 = scalar_lea.vmem %s0, %s271
      %p273 = pneg %p38
      %p274 = pneg %p35
      %p275 = scmp.lt.s32.totalorder %s17, 1
      %s276 = scalar_select %p275, %s17, 1
      %s277 = smul.addr %s276, 6
      %s278 = smul.addr %s277, 8
      %s279 = scalar_lea.vmem %s1, %s278
      %p280 = pneg %p64
      %p281 = pneg %p61
      %p282 = scmp.lt.s32.totalorder %s17, 1
      %s283 = scalar_select %p282, %s17, 1
      %s284 = smul.addr %s283, 6
      %s285 = smul.addr %s284, 8
      %s286 = scalar_lea.vmem %s2, %s285
      %p287 = pneg %p90
      %p288 = pneg %p87
      %p289 = scmp.lt.s32.totalorder %s17, 1
      %s290 = scalar_select %p289, %s17, 1
      %s291 = smul.addr %s290, 6
      %s292 = smul.addr %s291, 8
      %s293 = scalar_lea.vmem %s3, %s292
      %p294 = pneg %p116
      %p295 = pneg %p113
      %p296 = scmp.lt.s32.totalorder %s17, 1
      %s297 = scalar_select %p296, %s17, 1
      %s298 = smul.addr %s297, 2
      %s299 = smul.addr %s298, 8
      %s300 = scalar_lea.vmem %s4, %s299
      %p301 = pneg %p142
      %p302 = pneg %p139
      %p303 = scmp.lt.s32.totalorder %s17, 1
      %s304 = scalar_select %p303, %s17, 1
      %s305 = smul.addr %s304, 2
      %s306 = smul.addr %s305, 8
      %s307 = scalar_lea.vmem %s5, %s306
      %p308 = pneg %p168
      %p309 = pneg %p165
      %p310 = pneg %p194
      %p311 = pneg %p191
      %p312 = scmp.lt.s32.totalorder %s17, 1
      %s313 = scalar_select %p312, %s17, 1
      %s314 = smul.addr %s313, 8
      %s315 = scalar_lea.vmem %s6, %s314
      %p316 = scmp.lt.s32.totalorder %s17, 1
      %s317 = scalar_select %p316, %s17, 1
      %s318 = smul.addr %s317, 6
      %s319 = smul.addr %s318, 8
      %s320 = scalar_lea.vmem %s0, %s319
      %p321 = scmp.lt.s32.totalorder %s17, 1
      %s322 = scalar_select %p321, %s17, 1
      %s323 = smul.addr %s322, 6
      %s324 = smul.addr %s323, 8
      %s325 = scalar_lea.vmem %s1, %s324
      %p326 = scmp.lt.s32.totalorder %s17, 1
      %s327 = scalar_select %p326, %s17, 1
      %s328 = smul.addr %s327, 6
      %s329 = smul.addr %s328, 8
      %s330 = scalar_lea.vmem %s2, %s329
      %p331 = scmp.lt.s32.totalorder %s17, 1
      %s332 = scalar_select %p331, %s17, 1
      %s333 = smul.addr %s332, 6
      %s334 = smul.addr %s333, 8
      %s335 = scalar_lea.vmem %s3, %s334
      %p336 = scmp.lt.s32.totalorder %s17, 1
      %s337 = scalar_select %p336, %s17, 1
      %s338 = smul.addr %s337, 2
      %s339 = smul.addr %s338, 8
      %s340 = scalar_lea.vmem %s4, %s339
      %p341 = scmp.lt.s32.totalorder %s17, 1
      %s342 = scalar_select %p341, %s17, 1
      %s343 = smul.addr %s342, 2
      %s344 = smul.addr %s343, 8
      %s345 = scalar_lea.vmem %s5, %s344
      %p346 = scmp.lt.s32.totalorder %s17, 1
      %s347 = scalar_select %p346, %s17, 1
      %s348 = smul.addr %s347, 8
      %s349 = scalar_lea.vmem %s6, %s348
      %v350 = vld [vmem:[%s320] sm:$0xff]
      %v351 = vld [vmem:[%s320 + $0x8] sm:$0x3]
      %v352 = vld [vmem:[%s320 + $0x10] sm:$0xff]
      %v353 = vld [vmem:[%s320 + $0x18] sm:$0x3]
      %v354 = vld [vmem:[%s320 + $0x20] sm:$0xff]
      %v355 = vld [vmem:[%s320 + $0x28] sm:$0x3]
      %v356 = vld [vmem:[%s325] sm:$0xff]
      %v357 = vld [vmem:[%s325 + $0x8] sm:$0x3]
      %v358 = vld [vmem:[%s325 + $0x10] sm:$0xff]
      %v359 = vld [vmem:[%s325 + $0x18] sm:$0x3]
      %v360 = vld [vmem:[%s325 + $0x20] sm:$0xff]
      %v361 = vld [vmem:[%s325 + $0x28] sm:$0x3]
      %v362 = vld [vmem:[%s330] sm:$0xff]
      %v363 = vld [vmem:[%s330 + $0x8] sm:$0x3]
      %v364 = vld [vmem:[%s330 + $0x10] sm:$0xff]
      %v365 = vld [vmem:[%s330 + $0x18] sm:$0x3]
      %v366 = vld [vmem:[%s330 + $0x20] sm:$0xff]
      %v367 = vld [vmem:[%s330 + $0x28] sm:$0x3]
      %v368 = vld [vmem:[%s335] sm:$0xff]
      %v369 = vld [vmem:[%s335 + $0x8] sm:$0x3]
      %v370 = vld [vmem:[%s335 + $0x10] sm:$0xff]
      %v371 = vld [vmem:[%s335 + $0x18] sm:$0x3]
      %v372 = vld [vmem:[%s335 + $0x20] sm:$0xff]
      %v373 = vld [vmem:[%s335 + $0x28] sm:$0x3]
      %v374 = vld [vmem:[%s340] sm:$0xff]
      %v375 = vld [vmem:[%s340 + $0x8] sm:$0x3]
      %v376 = vld [vmem:[%s345] sm:$0xff]
      %v377 = vld [vmem:[%s345 + $0x8] sm:$0x3]
      %v378 = vmul.f32 %v368, %v376
      %v379 = vmul.f32 %v369, %v377
      %v380 = vmul.f32 %v370, %v376
      %v381 = vmul.f32 %v371, %v377
      %v382 = vmul.f32 %v372, %v376
      %v383 = vmul.f32 %v373, %v377
      %v384 = vsub.f32 %v378, %v356
      %v385 = vsub.f32 %v379, %v357
      %v386 = vsub.f32 %v380, %v358
      %v387 = vsub.f32 %v381, %v359
      %v388 = vsub.f32 %v382, %v360
      %v389 = vsub.f32 %v383, %v361
      %v390 = vand.u32 2147483647, %v384
      %v391 = vand.u32 2147483647, %v385
      %v392 = vand.u32 2147483647, %v386
      %v393 = vand.u32 2147483647, %v387
      %v394 = vand.u32 2147483647, %v388
      %v395 = vand.u32 2147483647, %v389
      %v396 = vmul.f32 %v362, %v374
      %v397 = vmul.f32 %v363, %v375
      %v398 = vmul.f32 %v364, %v374
      %v399 = vmul.f32 %v365, %v375
      %v400 = vmul.f32 %v366, %v374
      %v401 = vmul.f32 %v367, %v375
      %v402 = vsub.f32 %v396, %v350
      %v403 = vsub.f32 %v397, %v351
      %v404 = vsub.f32 %v398, %v352
      %v405 = vsub.f32 %v399, %v353
      %v406 = vsub.f32 %v400, %v354
      %v407 = vsub.f32 %v401, %v355
      %v408 = vand.u32 2147483647, %v402
      %v409 = vand.u32 2147483647, %v403
      %v410 = vand.u32 2147483647, %v404
      %v411 = vand.u32 2147483647, %v405
      %v412 = vand.u32 2147483647, %v406
      %v413 = vand.u32 2147483647, %v407
      %v414 = vadd.f32 %v390, %v408
      %v415 = vadd.f32 %v391, %v409
      %v416 = vadd.f32 %v392, %v410
      %v417 = vadd.f32 %v393, %v411
      %v418 = vadd.f32 %v394, %v412
      %v419 = vadd.f32 %v395, %v413
      %vm420 = vcmask 80896
      %v421 = vsel %vm420, %v414, 0.0
      %vm422 = vcmask 74752
      %v423 = vsel %vm422, %v415, 0.0
      %v424 = vadd.f32 %v421, %v423
      %v425 = vsel %vm420, %v416, 0.0
      %v426 = vadd.f32 %v424, %v425
      %v427 = vsel %vm422, %v417, 0.0
      %v428 = vadd.f32 %v426, %v427
      %v429 = vsel %vm420, %v418, 0.0
      %v430 = vadd.f32 %v428, %v429
      %v431 = vsel %vm422, %v419, 0.0
      %v432 = vadd.f32 %v430, %v431
      %433 = vadd.xlane.f32.xlu0 %v432
      %v434 = vpop.xlane.xlu0 %433
      %v435 = vrot.slane %v434, 4
      %v436 = vadd.f32 %v434, %v435
      %v437 = vrot.slane %v436, 2
      %v438 = vadd.f32 %v436, %v437
      %v439 = vrot.slane %v438, 1
      %v440 = vadd.f32 %v438, %v439
      %s441 = vtos %v440
      %s442 = sadd.f32 %s441, 0.0
      %v443 = vsub.f32 %v362, %v368
      %v444 = vsub.f32 %v363, %v369
      %v445 = vsub.f32 %v364, %v370
      %v446 = vsub.f32 %v365, %v371
      %v447 = vsub.f32 %v366, %v372
      %v448 = vsub.f32 %v367, %v373
      %v449 = vand.u32 2147483647, %v443
      %v450 = vand.u32 2147483647, %v444
      %v451 = vand.u32 2147483647, %v445
      %v452 = vand.u32 2147483647, %v446
      %v453 = vand.u32 2147483647, %v447
      %v454 = vand.u32 2147483647, %v448
      %v455 = vsel %vm420, %v449, 0.0
      %v456 = vsel %vm422, %v450, 0.0
      %v457 = vadd.f32 %v455, %v456
      %v458 = vsel %vm420, %v451, 0.0
      %v459 = vadd.f32 %v457, %v458
      %v460 = vsel %vm422, %v452, 0.0
      %v461 = vadd.f32 %v459, %v460
      %v462 = vsel %vm420, %v453, 0.0
      %v463 = vadd.f32 %v461, %v462
      %v464 = vsel %vm422, %v454, 0.0
      %v465 = vadd.f32 %v463, %v464
      %466 = vadd.xlane.f32.xlu0 %v465
      %v467 = vpop.xlane.xlu0 %466
      %v468 = vrot.slane %v467, 4
      %v469 = vadd.f32 %v467, %v468
      %v470 = vrot.slane %v469, 2
      %v471 = vadd.f32 %v469, %v470
      %v472 = vrot.slane %v471, 1
      %v473 = vadd.f32 %v471, %v472
      %s474 = vtos %v473
      %s475 = sadd.f32 %s474, 0.0
      %v476 = vadd.f32 %v350, %v352
      %v477 = vadd.f32 %v351, %v353
      %v478 = vadd.f32 %v476, %v354
      %v479 = vadd.f32 %v477, %v355
      %v480 = vmul.f32 %v478, 0.33333334
      %v481 = vmul.f32 %v479, 0.33333334
      %v482 = vadd.f32 %v356, %v358
      %v483 = vadd.f32 %v357, %v359
      %v484 = vadd.f32 %v482, %v360
      %v485 = vadd.f32 %v483, %v361
      %v486 = vmul.f32 %v484, 0.33333334
      %v487 = vmul.f32 %v485, 0.33333334
      %488 = vst [vmem:[#allocation2] sm:$0xff] 0.0
      %489 = vst [vmem:[#allocation2 + $0x8] sm:$0xff] 0.0
      %490 = vst [vmem:[#allocation2 + $0x10] sm:$0xff] 0.0
      %491 = vst [vmem:[#allocation2 + $0x18] sm:$0xff] 0.0
      %492 = vst [vmem:[#allocation2 + $0x20] sm:$0xff] 0.0
      %493 = vst [vmem:[#allocation2 + $0x28] sm:$0xff] 0.0
      %494 = vst [vmem:[#allocation2 + $0x30] sm:$0xff] 0.0
      %495 = vst [vmem:[#allocation2 + $0x38] sm:$0xff] 0.0
      %496 = vst.msk [vmem:[#allocation2] sm:$0xff] %vm420, %v374
      %497 = vst.msk [vmem:[#allocation2 + $0x8] sm:$0x3] %vm422, %v375
      %s498 = scalar_lea.vmem [#allocation2], 16
      %499 = vst.msk [vmem:[%s498] sm:$0xff] %vm420, %v376
      %500 = vst.msk [vmem:[%s498 + $0x8] sm:$0x3] %vm422, %v377
      %s501 = scalar_lea.vmem [#allocation2], 32
      %502 = vst.msk [vmem:[%s501] sm:$0xff] %vm420, %v480
      %503 = vst.msk [vmem:[%s501 + $0x8] sm:$0x3] %vm422, %v481
      %s504 = scalar_lea.vmem [#allocation2], 48
      %505 = vst.msk [vmem:[%s504] sm:$0xff] %vm420, %v486
      %506 = vst.msk [vmem:[%s504 + $0x8] sm:$0x3] %vm422, %v487
      %v507 = vld [vmem:[#allocation2] sm:$0xff]
      %v508 = vld [vmem:[#allocation2 + $0x8] sm:$0xff]
      %509 = vrot.lane.b32.xlu0 %v507, 1
      %v510 = vpop.permute.xlu0 %509
      %511 = vrot.lane.b32.xlu0 %v508, 1
      %v512 = vpop.permute.xlu0 %511
      %v513 = vsub.f32 %v507, %v510
      %v514 = vsub.f32 %v508, %v512
      %v515 = vand.u32 2147483647, %v513
      %v516 = vand.u32 2147483647, %v514
      %v517 = vld [vmem:[%s498] sm:$0xff]
      %v518 = vld [vmem:[%s498 + $0x8] sm:$0xff]
      %519 = vrot.lane.b32.xlu0 %v517, 1
      %v520 = vpop.permute.xlu0 %519
      %521 = vrot.lane.b32.xlu0 %v518, 1
      %v522 = vpop.permute.xlu0 %521
      %v523 = vsub.f32 %v517, %v520
      %v524 = vsub.f32 %v518, %v522
      %v525 = vand.u32 2147483647, %v523
      %v526 = vand.u32 2147483647, %v524
      %v527 = vld [vmem:[%s501] sm:$0xff]
      %v528 = vld [vmem:[%s501 + $0x8] sm:$0xff]
      %529 = vrot.lane.b32.xlu0 %v527, 1
      %v530 = vpop.permute.xlu0 %529
      %531 = vrot.lane.b32.xlu0 %v528, 1
      %v532 = vpop.permute.xlu0 %531
      %v533 = vsub.f32 %v527, %v530
      %v534 = vsub.f32 %v528, %v532
      %v535 = vand.u32 2147483647, %v533
      %v536 = vand.u32 2147483647, %v534
      %v537 = vld [vmem:[%s504] sm:$0xff]
      %v538 = vld [vmem:[%s504 + $0x8] sm:$0xff]
      %539 = vrot.lane.b32.xlu0 %v537, 1
      %v540 = vpop.permute.xlu0 %539
      %541 = vrot.lane.b32.xlu0 %v538, 1
      %v542 = vpop.permute.xlu0 %541
      %v543 = vsub.f32 %v537, %v540
      %v544 = vsub.f32 %v538, %v542
      %v545 = vand.u32 2147483647, %v543
      %v546 = vand.u32 2147483647, %v544
      %v547 = vadd.f32 %v515, %v525
      %v548 = vadd.f32 %v516, %v526
      %v549 = vmul.f32 %v547, -10.0
      %v550 = vmul.f32 %v548, -10.0
      %v551 = vmul.f32 %v549, 1.442695
      %v552 = vpow.pop %v551
      %v553 = vmul.f32 %v550, 1.442695
      %v554 = vpow.pop %v553
      %v555 = vmul.f32 %v547, %v552
      %v556 = vmul.f32 %v548, %v554
      %v557 = vadd.f32 %v555, %v556
      %558 = vadd.xlane.f32.xlu0 %v557
      %v559 = vpop.xlane.xlu0 %558
      %v560 = vrot.slane %v559, 4
      %v561 = vadd.f32 %v559, %v560
      %v562 = vrot.slane %v561, 2
      %v563 = vadd.f32 %v561, %v562
      %v564 = vrot.slane %v563, 1
      %v565 = vadd.f32 %v563, %v564
      %s566 = vtos %v565
      %v567 = vmax.f32 %v545, 0.01
      %v568 = vmax.f32 %v546, 0.01
      %v569 = vrcp.pop %v567
      %v570 = vrcp.pop %v568
      %v571 = vmul.f32 %v525, %v569
      %v572 = vmul.f32 %v526, %v570
      %v573 = vmax.f32 %v535, 0.01
      %v574 = vmax.f32 %v536, 0.01
      %v575 = vrcp.pop %v573
      %v576 = vrcp.pop %v574
      %v577 = vmul.f32 %v515, %v575
      %v578 = vmul.f32 %v516, %v576
      %v579 = vadd.f32 %v571, %v577
      %v580 = vadd.f32 %v572, %v578
      %v581 = vadd.f32 %v579, %v580
      %582 = vadd.xlane.f32.xlu0 %v581
      %v583 = vpop.xlane.xlu0 %582
      %v584 = vrot.slane %v583, 4
      %v585 = vadd.f32 %v583, %v584
      %v586 = vrot.slane %v585, 2
      %v587 = vadd.f32 %v585, %v586
      %v588 = vrot.slane %v587, 1
      %v589 = vadd.f32 %v587, %v588
      %s590 = vtos %v589
      %v591 = vrot.slane %v507, 7
      %v592 = vrot.slane %v508, 7
      %v593 = vlaneseq
      %v594 = vshrl.u32 %v593, 7
      %vm595 = vcmp.lt.s32.totalorder %v594, 1
      %v596 = vsel %vm595, %v591, %v592
      %v597 = vsel %vm595, %v592, %v591
      %v598 = vsub.f32 %v507, %v597
      %v599 = vsub.f32 %v508, %v596
      %v600 = vand.u32 2147483647, %v598
      %v601 = vand.u32 2147483647, %v599
      %v602 = vrot.slane %v517, 7
      %v603 = vrot.slane %v518, 7
      %v604 = vsel %vm595, %v602, %v603
      %v605 = vsel %vm595, %v603, %v602
      %v606 = vsub.f32 %v517, %v605
      %v607 = vsub.f32 %v518, %v604
      %v608 = vand.u32 2147483647, %v606
      %v609 = vand.u32 2147483647, %v607
      %v610 = vrot.slane %v527, 7
      %v611 = vrot.slane %v528, 7
      %v612 = vsel %vm595, %v610, %v611
      %v613 = vsel %vm595, %v611, %v610
      %v614 = vsub.f32 %v527, %v613
      %v615 = vsub.f32 %v528, %v612
      %v616 = vand.u32 2147483647, %v614
      %v617 = vand.u32 2147483647, %v615
      %v618 = vrot.slane %v537, 7
      %v619 = vrot.slane %v538, 7
      %v620 = vsel %vm595, %v618, %v619
      %v621 = vsel %vm595, %v619, %v618
      %v622 = vsub.f32 %v537, %v621
      %v623 = vsub.f32 %v538, %v620
      %v624 = vand.u32 2147483647, %v622
      %v625 = vand.u32 2147483647, %v623
      %v626 = vadd.f32 %v600, %v608
      %v627 = vadd.f32 %v601, %v609
      %v628 = vmul.f32 %v626, -10.0
      %v629 = vmul.f32 %v627, -10.0
      %v630 = vmul.f32 %v628, 1.442695
      %v631 = vpow.pop %v630
      %v632 = vmul.f32 %v629, 1.442695
      %v633 = vpow.pop %v632
      %v634 = vmul.f32 %v626, %v631
      %v635 = vmul.f32 %v627, %v633
      %v636 = vadd.f32 %v634, %v635
      %637 = vadd.xlane.f32.xlu0 %v636
      %v638 = vpop.xlane.xlu0 %637
      %v639 = vrot.slane %v638, 4
      %v640 = vadd.f32 %v638, %v639
      %v641 = vrot.slane %v640, 2
      %v642 = vadd.f32 %v640, %v641
      %v643 = vrot.slane %v642, 1
      %v644 = vadd.f32 %v642, %v643
      %s645 = vtos %v644
      %v646 = vmax.f32 %v624, 0.01
      %v647 = vmax.f32 %v625, 0.01
      %v648 = vrcp.pop %v646
      %v649 = vrcp.pop %v647
      %v650 = vmul.f32 %v608, %v648
      %v651 = vmul.f32 %v609, %v649
      %v652 = vmax.f32 %v616, 0.01
      %v653 = vmax.f32 %v617, 0.01
      %v654 = vrcp.pop %v652
      %v655 = vrcp.pop %v653
      %v656 = vmul.f32 %v600, %v654
      %v657 = vmul.f32 %v601, %v655
      %v658 = vadd.f32 %v650, %v656
      %v659 = vadd.f32 %v651, %v657
      %v660 = vadd.f32 %v658, %v659
      %661 = vadd.xlane.f32.xlu0 %v660
      %v662 = vpop.xlane.xlu0 %661
      %v663 = vrot.slane %v662, 4
      %v664 = vadd.f32 %v662, %v663
      %v665 = vrot.slane %v664, 2
      %v666 = vadd.f32 %v664, %v665
      %v667 = vrot.slane %v666, 1
      %v668 = vadd.f32 %v666, %v667
      %s669 = vtos %v668
      %s670 = sadd.f32 %s566, %s645
      %s671 = sadd.f32 %s670, 0.0
      %s672 = sadd.f32 %s590, %s669
      %s673 = sadd.f32 %s672, 0.0
      %s674 = smul.f32 %s475, 0.01
      %s675 = sadd.f32 %s442, %s674
      %s676 = smul.f32 %s675, 0.0016666667
      %s677 = smul.f32 %s671, 0.2
      %s678 = smul.f32 %s673, 0.15
      %s679 = sadd.f32 %s677, %s678
      %s680 = smul.f32 %s679, 0.004132231
      %s681 = sadd.f32 %s676, %s680
      %v682 = vstv %s681
      %683 = vst [vmem:[%s349] sm:$0xff] %v682
      %p684 = scmp.lt.s32.totalorder %s17, 1
      %s685 = scalar_select %p684, %s17, 1
      %s686 = smul.addr %s685, 8
      %s687 = scalar_lea.vmem %s6, %s686
      // Predicated region
      $region45: #{decom_loss2.1} parent=43 // pred_check
        %p688 = pneg %p191
      $region46: #{decom_loss2.1} parent=43 // pred_check_branch
        %690 = sbr.rel (%p688) target = $region48
      $region47: #{decom_loss2.1} parent=43 // pred_region
        _
      $region48: #{decom_loss2.1} parent=43 // pred_fallthru
        _
    $region44: #{decom_loss2.1} parent=5 // pred_fallthru
      _
    %p691 = scmp.le.s32.totalorder 2, %s12
    // Predicated region
    $region49: #{decom_loss2.1} parent=5 // pred_check
      %p692 = pneg %p691
    $region50: #{decom_loss2.1} parent=5 // pred_check_branch
      %694 = sbr.rel (%p692) target = $region52
    $region51: #{decom_loss2.1} parent=5 // pred_region
      %s695 = ssub.s32 %s12, 2
      // Predicated region
      $region53: #{decom_loss2.1} parent=51 // pred_check
        %p696 = pneg %p197
      $region54: #{decom_loss2.1} parent=51 // pred_check_branch
        %698 = sbr.rel (%p696) target = $region56
      $region55: #{decom_loss2.1} parent=51 // pred_region
        %p699 = scmp.lt.s32.totalorder %s18, 1
        %s700 = scalar_select %p699, %s18, 1
        %s701 = smul.addr %s700, 8
        %s702 = scalar_lea.vmem %s6, %s701
      $region56: #{decom_loss2.1} parent=51 // pred_fallthru
        _
    $region52: #{decom_loss2.1} parent=5 // pred_fallthru
      _
  $region6: #{decom_loss2.1} parent=0 // loop_footer
    %s16 = sadd.s32 1, %s12
  $region7: #{decom_loss2.1} parent=0 // loop_footer_branch
    %11 = sbr.rel target = $region3
  $region8: #{decom_loss2.1} parent=0 // loop_exit
    _

</llo_original>
